<compile_context>
chip_gen: v7x
topology: tpu7x:2x2x1
jax: 0.10.0
libtpu: 0.0.40
codegen_flags: <defaults>
</compile_context>

<pallas_src>
import jax
import jax.numpy as jnp
from jax.experimental import pallas as pl
from jax.experimental.pallas import tpu as pltpu


def _round_up(x, m):
    return ((x + m - 1) // m) * m


def _gcn_fused_kernel(a_ref, xw1_ref, b1_ref, w2_ref, b2_ref, out_ref, hw_ref):
    """Fused two-layer GCN.

    grid = (2 phases, R row tiles), rows inner.
      phase 0: HW[rows] = relu(A_rows @ XW1 + b1) @ W2   -> persistent VMEM scratch
      phase 1: OUT[rows] = A_rows @ HW + b2              (HW of ALL nodes resident)
    """
    phase = pl.program_id(0)
    i = pl.program_id(1)
    tm = a_ref.shape[0]

    @pl.when(phase == 0)
    def _():
        # Layer 1 (X @ W1 pre-folded on host): bf16 MXU inputs, f32 accumulate,
        # f32 bias + ReLU epilogue.
        h1 = jnp.dot(a_ref[...], xw1_ref[...], preferred_element_type=jnp.float32)
        h1 = jnp.maximum(h1 + b1_ref[...], 0.0)
        # Layer 2 projection (project-then-aggregate); stage lane-dense bf16 rows.
        hw = jnp.dot(h1.astype(jnp.bfloat16), w2_ref[...],
                     preferred_element_type=jnp.float32)
        row0 = pl.multiple_of(i * tm, tm)
        hw_ref[pl.ds(row0, tm), :] = hw.astype(hw_ref.dtype)
        # This grid step also writes back its (revisited-later) output block; keep the
        # bytes defined.  Phase 1 fully overwrites it.
        out_ref[...] = jnp.zeros_like(out_ref)

    @pl.when(phase == 1)
    def _():
        # Layer 2 aggregation over the projected features of ALL nodes (VMEM scratch).
        agg = jnp.dot(a_ref[...], hw_ref[...], preferred_element_type=jnp.float32)
        out_ref[...] = (agg + b2_ref[...]).astype(out_ref.dtype)


def gcn_forward(a_norm, x, w1, b1, w2, b2, *, tile_rows=None):
    """Two-layer GCN forward: relu(A @ X @ W1 + b1) -> A @ H @ W2 + b2 (fused)."""
    n, in_feats = x.shape
    h_feats = w1.shape[1]
    num_classes = w2.shape[1]
    c_pad = _round_up(num_classes, 128)          # lane-dense output / HW width

    # Row-tile size: whole graph for small N, 512-row tiles otherwise.
    if tile_rows is not None:
        tm = tile_rows
    elif n <= 1024:
        tm = n
    else:
        tm = 512
    if n % tm != 0:
        tm = n  # TODO(synk): pad/mask the last partial row tile for ragged N.
    r = n // tm
    grid = (2, r)                                # (phase, row tile), rows inner

    # One-time host-side setup: fold X @ W1 (f32), cast all MXU operands to bf16,
    # zero-pad the output head to a lane-dense 128-wide slab.
    a_bf = a_norm.astype(jnp.bfloat16)
    xw1_bf = (x @ w1).astype(jnp.bfloat16)                              # [N, H]
    w2_p = jnp.pad(w2, ((0, 0), (0, c_pad - num_classes))).astype(jnp.bfloat16)
    b2_p = jnp.pad(b2, ((0, 0), (0, c_pad - num_classes)))              # f32

    # VMEM footprint: double-buffered A / OUT tiles + resident operands + HW scratch.
    vmem_bytes = (
        2 * tm * n * 2               # A row tiles (bf16, double-buffered)
        + 2 * tm * c_pad * 4         # output tiles (f32, double-buffered)
        + 2 * n * h_feats * 2        # XW1 resident (bf16)
        + 2 * h_feats * c_pad * 2    # W2 resident (bf16)
        + 4 * 8 * 128 * 4            # biases (padded small tiles)
        + n * c_pad * 2              # HW persistent scratch (bf16)
        + (2 << 20)                  # margin
    )
    if vmem_bytes > (48 << 20):
        # TODO(synk): large-N fallback (HW in HBM + K-tiled aggregation) not needed
        # at demo size.
        raise NotImplementedError("graph too large for the fused VMEM-resident path")

    cost = pl.CostEstimate(
        flops=2 * n * n * h_feats + 2 * n * h_feats * c_pad + 2 * n * n * c_pad,
        transcendentals=0,
        bytes_accessed=(2 * n * n * 2 + n * h_feats * 2 + h_feats * c_pad * 2
                        + 2 * n * c_pad * 4),
    )

    def resident(shape):
        return pl.BlockSpec(shape, lambda p, i: (0, 0))

    def rowtile(cols):
        return pl.BlockSpec((tm, cols), lambda p, i: (i, 0))

    out = pl.pallas_call(
        _gcn_fused_kernel,
        out_shape=jax.ShapeDtypeStruct((n, c_pad), jnp.float32),
        grid=grid,
        in_specs=[
            rowtile(n),                          # A row tile    [tm, N]   bf16
            resident((n, h_feats)),              # XW1           [N, H]    bf16
            resident((1, h_feats)),              # b1            [1, H]    f32
            resident((h_feats, c_pad)),          # W2 (padded)   [H, 128]  bf16
            resident((1, c_pad)),                # b2 (padded)   [1, 128]  f32
        ],
        out_specs=rowtile(c_pad),
        scratch_shapes=[pltpu.VMEM((n, c_pad), jnp.bfloat16)],   # persistent HW
        compiler_params=pltpu.CompilerParams(
            # The persistent HW scratch couples phase 1's row tiles to ALL of phase 0's
            # row tiles, so both grid axes must stay 'arbitrary' (sequential); the fused
            # VMEM-scratch variant therefore does not shard across v7x TensorCores.
            dimension_semantics=("arbitrary", "arbitrary"),
            vmem_limit_bytes=int(vmem_bytes),
        ),
        cost_estimate=cost,
    )(a_bf, xw1_bf, b1, w2_p, b2_p)

    return out[:, :num_classes]


def build_normalized_adjacency(src, dst, n_nodes):
    """Dense D_in^{-1/2} A D_out^{-1/2}, matching DGL GraphConv norm='both'."""
    a = jnp.zeros((n_nodes, n_nodes), jnp.float32).at[dst, src].add(1.0)
    out_deg = a.sum(axis=0)  # out-degree of each src node
    in_deg = a.sum(axis=1)   # in-degree of each dst node
    inv_sqrt_out = jnp.where(out_deg > 0, jax.lax.rsqrt(jnp.maximum(out_deg, 1.0)), 0.0)
    inv_sqrt_in = jnp.where(in_deg > 0, jax.lax.rsqrt(jnp.maximum(in_deg, 1.0)), 0.0)
    return inv_sqrt_in[:, None] * a * inv_sqrt_out[None, :]


def init_gcn_params(key, in_feats, h_feats, num_classes):
    """Glorot-uniform weights + zero bias, like DGL GraphConv.reset_parameters()."""
    k1, k2 = jax.random.split(key)

    def glorot(k, fan_in, fan_out):
        limit = (6.0 / (fan_in + fan_out)) ** 0.5
        return jax.random.uniform(k, (fan_in, fan_out), jnp.float32, -limit, limit)

    w1 = glorot(k1, in_feats, h_feats)
    b1 = jnp.zeros((1, h_feats), jnp.float32)
    w2 = glorot(k2, h_feats, num_classes)
    b2 = jnp.zeros((1, num_classes), jnp.float32)
    return w1, b1, w2, b2


if __name__ == "__main__":
    key = jax.random.PRNGKey(0)
    k_x, k_src, k_dst, k_params = jax.random.split(key, 4)

    N = 128          # number of graph nodes
    E = 512          # number of edges
    IN_FEATS = 16    # node feature dim
    H_FEATS = 32     # hidden dim
    NUM_CLASSES = 4  # output dim (regression heads)

    # Deterministic synthetic graph + features (the DGL/pandas dataset has no Pallas analog).
    x = jax.random.normal(k_x, (N, IN_FEATS), jnp.float32)
    src = jax.random.randint(k_src, (E,), 0, N)
    dst = jax.random.randint(k_dst, (E,), 0, N)
    a_norm = build_normalized_adjacency(src, dst, N)  # build once; reuse across steps

    w1, b1, w2, b2 = init_gcn_params(k_params, IN_FEATS, H_FEATS, NUM_CLASSES)

    out = gcn_forward(a_norm, x, w1, b1, w2, b2)
    jax.block_until_ready(out)

    # Pure-JAX f32 reference of the same semantics (kernel uses bf16 MXU inputs,
    # f32 accumulation -> loosened tolerance).
    ref = jnp.maximum(a_norm @ x @ w1 + b1, 0.0)
    ref = a_norm @ ref @ w2 + b2
    assert out.shape == (N, NUM_CLASSES)
    assert jnp.allclose(out, ref, atol=5e-2, rtol=5e-2), float(jnp.max(jnp.abs(out - ref)))

    print("KERNEL_OK")
</pallas_src>

<mosaic_0001>
module attributes {stable_mosaic.version = 11 : i64} {
  func.func @_gcn_fused_kernel(%arg0: i32, %arg1: i32, %arg2: memref<128x128xbf16, #tpu.memory_space<vmem>>, %arg3: memref<128x32xbf16, #tpu.memory_space<vmem>>, %arg4: memref<1x32xf32, #tpu.memory_space<vmem>>, %arg5: memref<32x128xbf16, #tpu.memory_space<vmem>>, %arg6: memref<1x128xf32, #tpu.memory_space<vmem>>, %arg7: memref<128x128xf32, #tpu.memory_space<vmem>>, %arg8: memref<128x128xbf16, #tpu.memory_space<vmem>>) attributes {dimension_semantics = [#tpu.dimension_semantics<arbitrary>, #tpu.dimension_semantics<arbitrary>], iteration_bounds = array<i64: 2, 1>, scalar_prefetch = 0 : i64, scratch_operands = 1 : i64, tpu.core_type = #tpu.core_type<tc>, window_params = [{transform_indices = @transform_0, window_bounds = array<i64: 128, 128>}, {pipeline_mode = #tpu.pipeline_mode<synchronous>, transform_indices = @transform_1, window_bounds = array<i64: 128, 32>}, {pipeline_mode = #tpu.pipeline_mode<synchronous>, transform_indices = @transform_2, window_bounds = array<i64: 1, 32>}, {pipeline_mode = #tpu.pipeline_mode<synchronous>, transform_indices = @transform_3, window_bounds = array<i64: 32, 128>}, {pipeline_mode = #tpu.pipeline_mode<synchronous>, transform_indices = @transform_4, window_bounds = array<i64: 1, 128>}, {transform_indices = @transform_5, window_bounds = array<i64: 128, 128>}]} {
    %c0_i32 = arith.constant 0 : i32
    %0 = arith.cmpi eq, %arg0, %c0_i32 : i32
    %1 = arith.extui %0 : i1 to i32
    %c0_i32_0 = arith.constant 0 : i32
    %2 = arith.cmpi ne, %1, %c0_i32_0 : i32
    scf.if %2 {
      %c0 = arith.constant 0 : index
      %c0_2 = arith.constant 0 : index
      %6 = vector.load %arg2[%c0, %c0_2] : memref<128x128xbf16, #tpu.memory_space<vmem>>, vector<128x128xbf16>
      %c0_3 = arith.constant 0 : index
      %c0_4 = arith.constant 0 : index
      %7 = vector.load %arg3[%c0_3, %c0_4] : memref<128x32xbf16, #tpu.memory_space<vmem>>, vector<128x32xbf16>
      %cst = arith.constant dense<0.000000e+00> : vector<128x32xf32>
      %8 = tpu.matmul %6, %7, %cst {dimension_numbers = #tpu.dot_dimension_numbers<[1], [0], [0], [1], [0, 0, 1, 1], [], []>} : vector<128x128xbf16>, vector<128x32xbf16>, vector<128x32xf32> -> vector<128x32xf32>
      %c0_5 = arith.constant 0 : index
      %c0_6 = arith.constant 0 : index
      %9 = vector.load %arg4[%c0_5, %c0_6] : memref<1x32xf32, #tpu.memory_space<vmem>>, vector<1x32xf32>
      %10 = vector.broadcast %9 : vector<1x32xf32> to vector<128x32xf32>
      %11 = arith.addf %8, %10 : vector<128x32xf32>
      %cst_7 = arith.constant 0.000000e+00 : f32
      %12 = vector.broadcast %cst_7 : f32 to vector<128x32xf32>
      %13 = arith.maximumf %11, %12 : vector<128x32xf32>
      %14 = arith.truncf %13 : vector<128x32xf32> to vector<128x32xbf16>
      %c0_8 = arith.constant 0 : index
      %c0_9 = arith.constant 0 : index
      %15 = vector.load %arg5[%c0_8, %c0_9] : memref<32x128xbf16, #tpu.memory_space<vmem>>, vector<32x128xbf16>
      %cst_10 = arith.constant dense<0.000000e+00> : vector<128x128xf32>
      %16 = tpu.matmul %14, %15, %cst_10 {dimension_numbers = #tpu.dot_dimension_numbers<[1], [0], [0], [1], [0, 0, 1, 1], [], []>} : vector<128x32xbf16>, vector<32x128xbf16>, vector<128x128xf32> -> vector<128x128xf32>
      %c128_i32 = arith.constant 128 : i32
      %17 = arith.muli %arg1, %c128_i32 : i32
      %18 = tpu.assume_multiple %17, 128 : i32
      %19 = arith.truncf %16 : vector<128x128xf32> to vector<128x128xbf16>
      %20 = arith.index_cast %18 : i32 to index
      %c0_11 = arith.constant 0 : index
      %21 = vector.load %arg8[%20, %c0_11] : memref<128x128xbf16, #tpu.memory_space<vmem>>, vector<128x128xbf16>
      tpu.vector_store %arg8[%20, %c0_11], %19 {strides = array<i32>} : memref<128x128xbf16, #tpu.memory_space<vmem>>, vector<128x128xbf16>,
      %cst_12 = arith.constant 0.000000e+00 : f32
      %22 = vector.broadcast %cst_12 : f32 to vector<128x128xf32>
      %c0_13 = arith.constant 0 : index
      %c0_14 = arith.constant 0 : index
      %23 = vector.load %arg7[%c0_13, %c0_14] : memref<128x128xf32, #tpu.memory_space<vmem>>, vector<128x128xf32>
      tpu.vector_store %arg7[%c0_13, %c0_14], %22 {strides = array<i32>} : memref<128x128xf32, #tpu.memory_space<vmem>>, vector<128x128xf32>,
    } else {
    }
    %c1_i32 = arith.constant 1 : i32
    %3 = arith.cmpi eq, %arg0, %c1_i32 : i32
    %4 = arith.extui %3 : i1 to i32
    %c0_i32_1 = arith.constant 0 : i32
    %5 = arith.cmpi ne, %4, %c0_i32_1 : i32
    scf.if %5 {
      %c0 = arith.constant 0 : index
      %c0_2 = arith.constant 0 : index
      %6 = vector.load %arg2[%c0, %c0_2] : memref<128x128xbf16, #tpu.memory_space<vmem>>, vector<128x128xbf16>
      %c0_3 = arith.constant 0 : index
      %c0_4 = arith.constant 0 : index
      %7 = vector.load %arg8[%c0_3, %c0_4] : memref<128x128xbf16, #tpu.memory_space<vmem>>, vector<128x128xbf16>
      %cst = arith.constant dense<0.000000e+00> : vector<128x128xf32>
      %8 = tpu.matmul %6, %7, %cst {dimension_numbers = #tpu.dot_dimension_numbers<[1], [0], [0], [1], [0, 0, 1, 1], [], []>} : vector<128x128xbf16>, vector<128x128xbf16>, vector<128x128xf32> -> vector<128x128xf32>
      %c0_5 = arith.constant 0 : index
      %c0_6 = arith.constant 0 : index
      %9 = vector.load %arg6[%c0_5, %c0_6] : memref<1x128xf32, #tpu.memory_space<vmem>>, vector<1x128xf32>
      %10 = vector.broadcast %9 : vector<1x128xf32> to vector<128x128xf32>
      %11 = arith.addf %8, %10 : vector<128x128xf32>
      %c0_7 = arith.constant 0 : index
      %c0_8 = arith.constant 0 : index
      %12 = vector.load %arg7[%c0_7, %c0_8] : memref<128x128xf32, #tpu.memory_space<vmem>>, vector<128x128xf32>
      tpu.vector_store %arg7[%c0_7, %c0_8], %11 {strides = array<i32>} : memref<128x128xf32, #tpu.memory_space<vmem>>, vector<128x128xf32>,
    } else {
    }
    return
  }
  func.func @transform_0(%arg0: i32, %arg1: i32) -> (i32, i32) {
    %c0_i32 = arith.constant 0 : i32
    %c0_i32_0 = arith.constant 0 : i32
    return %arg1, %c0_i32 : i32, i32
  }
  func.func @transform_1(%arg0: i32, %arg1: i32) -> (i32, i32) {
    %c0_i32 = arith.constant 0 : i32
    %c0_i32_0 = arith.constant 0 : i32
    %c0_i32_1 = arith.constant 0 : i32
    return %c0_i32, %c0_i32_0 : i32, i32
  }
  func.func @transform_2(%arg0: i32, %arg1: i32) -> (i32, i32) {
    %c0_i32 = arith.constant 0 : i32
    %c0_i32_0 = arith.constant 0 : i32
    %c0_i32_1 = arith.constant 0 : i32
    return %c0_i32, %c0_i32_0 : i32, i32
  }
  func.func @transform_3(%arg0: i32, %arg1: i32) -> (i32, i32) {
    %c0_i32 = arith.constant 0 : i32
    %c0_i32_0 = arith.constant 0 : i32
    %c0_i32_1 = arith.constant 0 : i32
    return %c0_i32, %c0_i32_0 : i32, i32
  }
  func.func @transform_4(%arg0: i32, %arg1: i32) -> (i32, i32) {
    %c0_i32 = arith.constant 0 : i32
    %c0_i32_0 = arith.constant 0 : i32
    %c0_i32_1 = arith.constant 0 : i32
    return %c0_i32, %c0_i32_0 : i32, i32
  }
  func.func @transform_5(%arg0: i32, %arg1: i32) -> (i32, i32) {
    %c0_i32 = arith.constant 0 : i32
    %c0_i32_0 = arith.constant 0 : i32
    return %arg1, %c0_i32 : i32, i32
  }
}

</mosaic_0001>

<llo_original>
// kernel: tpu_custom_call.1
$region0: #{tpu_custom_call.1}
  #allocation0 [shape = 'u32[]', space=smem, size = 0x4, offset = 0x4, fixed_abs, tag = 'smem constant byte address 0x4 - core index']
  #allocation1 [shape = 'u32[144,128]{1,0:T(1,128)}', space=vmem, size = 0x12000, scoped, tag = 'internal scratch']
  #allocation2 [shape = 'bf16[128,128]{1,0:T(16,128)(2,1)}', space=vmem, size = 0x8000, scoped, tag = 'scratch operand']
  %s0 = inlined_call_operand.vmem [shape: bf16[128,128], index: 0, kind: input, shape index: {}]
  %s1 = inlined_call_operand.vmem [shape: bf16[128,32], index: 1, kind: input, shape index: {}]
  %s2 = inlined_call_operand.vmem [shape: f32[1,32], index: 2, kind: input, shape index: {}]
  %s3 = inlined_call_operand.vmem [shape: bf16[32,128], index: 3, kind: input, shape index: {}]
  %s4 = inlined_call_operand.vmem [shape: f32[1,128], index: 4, kind: input, shape index: {}]
  %s5 = inlined_call_operand.hbm [shape: f32[128,128], index: 5, kind: output, shape index: {}]
  %s6 = sld [smem:[#allocation0]]
  $region61: #{tpu_custom_call.1} parent=0
    _
  %s8 = ssub.s32 1, %s6
  %s9 = scalar_select 0, %s8, %s6
  $region1: #{tpu_custom_call.1} parent=0
    #allocation3 [shape = 'u8[65536]{0}', space=vmem, size = 0x10000, scoped, tag = 'output window, operand 0, single buffered']
    #allocation4 [shape = 's32[2]{0}', space=sflag, size = 0x8, scoped, tag = 'scoped memory for tpu_custom_call.1']
    %10 = vsyncpa [#allocation4], 0
    loop: start=0, step=1, limit=4
    $region2: #{tpu_custom_call.1} parent=1 // loop_pre_header
      _
    $region3: #{tpu_custom_call.1} parent=1 // loop_header
      %s12 = sphi 0, %s16
      %p13 = scmp.ge.s32.totalorder %s12, 4
      %s19 = sphi 0, %s31
      %s20 = sphi 0, %s27
      %s21 = sphi 0, %s19
      %s22 = sphi 0, %s20
      %s23 = sphi 0, %s21
      %s24 = sphi 0, %s22
      %s34 = sphi 0, %s36
      %s37 = sphi 0, %s34
      %s38 = sphi 0, %s37
      %s54 = sphi 0, %s38
      %s58 = sphi 0, %s58
      %s60 = sphi 0, %s58
      %s61 = sphi 0, %s60
      %s75 = sphi 0, %s61
      %s79 = sphi 0, %s79
      %s81 = sphi 0, %s79
      %s82 = sphi 0, %s81
      %s96 = sphi 0, %s82
      %s100 = sphi 0, %s100
      %s102 = sphi 0, %s100
      %s103 = sphi 0, %s102
      %s117 = sphi 0, %s103
      %s121 = sphi 0, %s121
      %s123 = sphi 0, %s121
      %s124 = sphi 0, %s123
      %s138 = sphi 0, %s124
      %s144 = sphi 0, %s146
      %s147 = sphi 0, %s144
      %s148 = sphi 0, %s147
      %s164 = sphi 0, %s148
    $region4: #{tpu_custom_call.1} parent=1 // loop_header_branch
      %15 = sbr.rel (%p13) target = $region8
    $region5: #{tpu_custom_call.1} parent=1 // loop_body
      %s17 = ssub.s32 %s12, 1
      %s18 = ssub.s32 %s12, 2
      %s25 = sadd.s32 1, %s20
      %p26 = scmp.ge.s32.totalorder %s25, 1
      %s27 = scalar_select %p26, 0, %s25
      %s28 = sadd.s32 1, %s19
      %s29 = scalar_select %p26, %s28, %s19
      %p30 = scmp.ge.s32.totalorder %s29, 2
      %s31 = scalar_select %p30, 0, %s29
      %s32 = ssub.s32 %s20, %s27
      %p33 = scmp.eq.s32.totalorder %s32, 0
      %s35 = sadd.s32 %s34, 1
      %s36 = scalar_select %p33, %s34, %s35
      %p39 = pneg %p33
      %p40 = scmp.eq.s32.totalorder %s12, 1
      %p41 = por %p39, %p40
      %p42 = scmp.ne.s32.totalorder %s34, %s37
      %p43 = scmp.eq.s32.totalorder %s12, 0
      %p44 = por %p42, %p43
      %p45 = scmp.ne.s32.totalorder %s34, %s37
      %p46 = scmp.eq.s32.totalorder %s17, 1
      %p47 = por %p45, %p46
      %p48 = scmp.ne.s32.totalorder %s37, %s38
      %p49 = scmp.eq.s32.totalorder %s17, 0
      %p50 = por %p48, %p49
      %p51 = scmp.ne.s32.totalorder %s37, %s38
      %p52 = scmp.eq.s32.totalorder %s18, 1
      %p53 = por %p51, %p52
      %p55 = scmp.ne.s32.totalorder %s38, %s54
      %p56 = scmp.eq.s32.totalorder %s18, 0
      %p57 = por %p55, %p56
      %s59 = sadd.s32 %s58, 1
      %p62 = scmp.eq.s32.totalorder %s12, 1
      %p63 = scmp.ne.s32.totalorder %s58, %s60
      %p64 = scmp.eq.s32.totalorder %s12, 0
      %p65 = por %p63, %p64
      %p66 = scmp.ne.s32.totalorder %s58, %s60
      %p67 = scmp.eq.s32.totalorder %s17, 1
      %p68 = por %p66, %p67
      %p69 = scmp.ne.s32.totalorder %s60, %s61
      %p70 = scmp.eq.s32.totalorder %s17, 0
      %p71 = por %p69, %p70
      %p72 = scmp.ne.s32.totalorder %s60, %s61
      %p73 = scmp.eq.s32.totalorder %s18, 1
      %p74 = por %p72, %p73
      %p76 = scmp.ne.s32.totalorder %s61, %s75
      %p77 = scmp.eq.s32.totalorder %s18, 0
      %p78 = por %p76, %p77
      %s80 = sadd.s32 %s79, 1
      %p83 = scmp.eq.s32.totalorder %s12, 1
      %p84 = scmp.ne.s32.totalorder %s79, %s81
      %p85 = scmp.eq.s32.totalorder %s12, 0
      %p86 = por %p84, %p85
      %p87 = scmp.ne.s32.totalorder %s79, %s81
      %p88 = scmp.eq.s32.totalorder %s17, 1
      %p89 = por %p87, %p88
      %p90 = scmp.ne.s32.totalorder %s81, %s82
      %p91 = scmp.eq.s32.totalorder %s17, 0
      %p92 = por %p90, %p91
      %p93 = scmp.ne.s32.totalorder %s81, %s82
      %p94 = scmp.eq.s32.totalorder %s18, 1
      %p95 = por %p93, %p94
      %p97 = scmp.ne.s32.totalorder %s82, %s96
      %p98 = scmp.eq.s32.totalorder %s18, 0
      %p99 = por %p97, %p98
      %s101 = sadd.s32 %s100, 1
      %p104 = scmp.eq.s32.totalorder %s12, 1
      %p105 = scmp.ne.s32.totalorder %s100, %s102
      %p106 = scmp.eq.s32.totalorder %s12, 0
      %p107 = por %p105, %p106
      %p108 = scmp.ne.s32.totalorder %s100, %s102
      %p109 = scmp.eq.s32.totalorder %s17, 1
      %p110 = por %p108, %p109
      %p111 = scmp.ne.s32.totalorder %s102, %s103
      %p112 = scmp.eq.s32.totalorder %s17, 0
      %p113 = por %p111, %p112
      %p114 = scmp.ne.s32.totalorder %s102, %s103
      %p115 = scmp.eq.s32.totalorder %s18, 1
      %p116 = por %p114, %p115
      %p118 = scmp.ne.s32.totalorder %s103, %s117
      %p119 = scmp.eq.s32.totalorder %s18, 0
      %p120 = por %p118, %p119
      %s122 = sadd.s32 %s121, 1
      %p125 = scmp.eq.s32.totalorder %s12, 1
      %p126 = scmp.ne.s32.totalorder %s121, %s123
      %p127 = scmp.eq.s32.totalorder %s12, 0
      %p128 = por %p126, %p127
      %p129 = scmp.ne.s32.totalorder %s121, %s123
      %p130 = scmp.eq.s32.totalorder %s17, 1
      %p131 = por %p129, %p130
      %p132 = scmp.ne.s32.totalorder %s123, %s124
      %p133 = scmp.eq.s32.totalorder %s17, 0
      %p134 = por %p132, %p133
      %p135 = scmp.ne.s32.totalorder %s123, %s124
      %p136 = scmp.eq.s32.totalorder %s18, 1
      %p137 = por %p135, %p136
      %p139 = scmp.ne.s32.totalorder %s124, %s138
      %p140 = scmp.eq.s32.totalorder %s18, 0
      %p141 = por %p139, %p140
      %s142 = ssub.s32 %s20, %s27
      %p143 = scmp.eq.s32.totalorder %s142, 0
      %s145 = sadd.s32 %s144, 1
      %s146 = scalar_select %p143, %s144, %s145
      %p149 = pneg %p143
      %p150 = scmp.eq.s32.totalorder %s12, 1
      %p151 = por %p149, %p150
      %p152 = scmp.ne.s32.totalorder %s144, %s147
      %p153 = scmp.eq.s32.totalorder %s12, 0
      %p154 = por %p152, %p153
      %p155 = scmp.ne.s32.totalorder %s144, %s147
      %p156 = scmp.eq.s32.totalorder %s17, 1
      %p157 = por %p155, %p156
      %p158 = scmp.ne.s32.totalorder %s147, %s148
      %p159 = scmp.eq.s32.totalorder %s17, 0
      %p160 = por %p158, %p159
      %p161 = scmp.ne.s32.totalorder %s147, %s148
      %p162 = scmp.eq.s32.totalorder %s18, 1
      %p163 = por %p161, %p162
      %p165 = scmp.ne.s32.totalorder %s148, %s164
      %p166 = scmp.eq.s32.totalorder %s18, 0
      %p167 = por %p165, %p166
      %p168 = scmp.le.s32.totalorder 1, %s12
      %p169 = scmp.lt.s32.totalorder %s12, 3
      %p170 = pnand %p168, %p169
      %p171 = pneg %p170
      // Predicated region
      $region9: #{tpu_custom_call.1} parent=5 // pred_check
        _
      $region10: #{tpu_custom_call.1} parent=5 // pred_check_branch
        %173 = sbr.rel (%p170) target = $region12
      $region11: #{tpu_custom_call.1} parent=5 // pred_region
        %s174 = ssub.s32 %s12, 1
        // Predicated region
        $region13: #{tpu_custom_call.1} parent=11 // pred_check
          %p175 = pneg %p50
        $region14: #{tpu_custom_call.1} parent=11 // pred_check_branch
          %177 = sbr.rel (%p175) target = $region16
        $region15: #{tpu_custom_call.1} parent=11 // pred_region
          %s178 = smul.u32 16, %s22
          %p179 = scmp.lt.s32.totalorder %s178, 15
          %s180 = scalar_select %p179, %s178, 15
          %s181 = smul.addr %s180, 4
          %s182 = scalar_lea.vmem %s0, %s181
          %s183 = smul.u32 16, %s22
        $region16: #{tpu_custom_call.1} parent=11 // pred_fallthru
          _
        // Predicated region
        $region17: #{tpu_custom_call.1} parent=11 // pred_check
          %p184 = pneg %p71
        $region18: #{tpu_custom_call.1} parent=11 // pred_check_branch
          %186 = sbr.rel (%p184) target = $region20
        $region19: #{tpu_custom_call.1} parent=11 // pred_region
          _
        $region20: #{tpu_custom_call.1} parent=11 // pred_fallthru
          _
        // Predicated region
        $region21: #{tpu_custom_call.1} parent=11 // pred_check
          %p187 = pneg %p92
        $region22: #{tpu_custom_call.1} parent=11 // pred_check_branch
          %189 = sbr.rel (%p187) target = $region24
        $region23: #{tpu_custom_call.1} parent=11 // pred_region
          _
        $region24: #{tpu_custom_call.1} parent=11 // pred_fallthru
          _
        // Predicated region
        $region25: #{tpu_custom_call.1} parent=11 // pred_check
          %p190 = pneg %p113
        $region26: #{tpu_custom_call.1} parent=11 // pred_check_branch
          %192 = sbr.rel (%p190) target = $region28
        $region27: #{tpu_custom_call.1} parent=11 // pred_region
          _
        $region28: #{tpu_custom_call.1} parent=11 // pred_fallthru
          _
        // Predicated region
        $region29: #{tpu_custom_call.1} parent=11 // pred_check
          %p193 = pneg %p134
        $region30: #{tpu_custom_call.1} parent=11 // pred_check_branch
          %195 = sbr.rel (%p193) target = $region32
        $region31: #{tpu_custom_call.1} parent=11 // pred_region
          _
        $region32: #{tpu_custom_call.1} parent=11 // pred_fallthru
          _
      $region12: #{tpu_custom_call.1} parent=5 // pred_fallthru
        _
      %p196 = scmp.lt.s32.totalorder %s12, 2
      // Predicated region
      $region33: #{tpu_custom_call.1} parent=5 // pred_check
        %p197 = pneg %p196
      $region34: #{tpu_custom_call.1} parent=5 // pred_check_branch
        %199 = sbr.rel (%p197) target = $region36
      $region35: #{tpu_custom_call.1} parent=5 // pred_region
        _
      $region36: #{tpu_custom_call.1} parent=5 // pred_fallthru
        _
      %p200 = scmp.le.s32.totalorder 1, %s12
      %p201 = scmp.lt.s32.totalorder %s12, 3
      %p202 = pnand %p200, %p201
      %p203 = pneg %p202
      // Predicated region
      $region37: #{tpu_custom_call.1} parent=5 // pred_check
        _
      $region38: #{tpu_custom_call.1} parent=5 // pred_check_branch
        %205 = sbr.rel (%p202) target = $region40
      $region39: #{tpu_custom_call.1} parent=5 // pred_region
        %s206 = ssub.s32 %s12, 1
        %s207 = smul.u32 16, %s22
        %p208 = scmp.lt.s32.totalorder %s207, 15
        %s209 = scalar_select %p208, %s207, 15
        %s210 = smul.addr %s209, 4
        %s211 = scalar_lea.vmem %s0, %s210
        %p212 = pneg %p50
        %p213 = pneg %p47
        %p214 = pneg %p71
        %p215 = pneg %p68
        %p216 = pneg %p92
        %p217 = pneg %p89
        %p218 = pneg %p113
        %p219 = pneg %p110
        %p220 = pneg %p134
        %p221 = pneg %p131
        %p222 = pneg %p160
        %p223 = pneg %p157
        %s224 = smul.u32 16, %s22
        %p225 = scmp.lt.s32.totalorder %s224, 15
        %s226 = scalar_select %p225, %s224, 15
        %s227 = smul.addr %s226, 4
        %s228 = scalar_lea.vmem %s0, %s227
        %s229 = smul.u32 16, %s22
        %s230 = smul.u32 16, %s22
        %p232 = scmp.eq.s32.totalorder %s21, 0
        // Predicated region
        $region41: #{tpu_custom_call.1} parent=39 // pred_check
          %p233 = pneg %p232
        $region42: #{tpu_custom_call.1} parent=39 // pred_check_branch
          %235 = sbr.rel (%p233) target = $region44
        $region43: #{tpu_custom_call.1} parent=39 // pred_region
          %v236 = vld [vmem:[%s228] sm:$0xf]
          %v237 = vld [vmem:[%s228 + $0x4] sm:$0xf]
          %v238 = vld [vmem:[%s228 + $0x8] sm:$0xf]
          %v239 = vld [vmem:[%s228 + $0xc] sm:$0xf]
          %v240 = vld [vmem:[%s228 + $0x10] sm:$0xf]
          %v241 = vld [vmem:[%s228 + $0x14] sm:$0xf]
          %v242 = vld [vmem:[%s228 + $0x18] sm:$0xf]
          %v243 = vld [vmem:[%s228 + $0x1c] sm:$0xf]
          %v244 = vld [vmem:[%s228 + $0x20] sm:$0xf]
          %v245 = vld [vmem:[%s228 + $0x24] sm:$0xf]
          %v246 = vld [vmem:[%s228 + $0x28] sm:$0xf]
          %v247 = vld [vmem:[%s228 + $0x2c] sm:$0xf]
          %v248 = vld [vmem:[%s228 + $0x30] sm:$0xf]
          %v249 = vld [vmem:[%s228 + $0x34] sm:$0xf]
          %v250 = vld [vmem:[%s228 + $0x38] sm:$0xf]
          %v251 = vld [vmem:[%s228 + $0x3c] sm:$0xf]
          %v252 = vld [vmem:[%s1] sm:$0xf]
          %v253 = vld [vmem:[%s1 + $0x4] sm:$0xf]
          %v254 = vld [vmem:[%s1 + $0x8] sm:$0xf]
          %v255 = vld [vmem:[%s1 + $0xc] sm:$0xf]
          %v256 = vld [vmem:[%s1 + $0x10] sm:$0xf]
          %v257 = vld [vmem:[%s1 + $0x14] sm:$0xf]
          %v258 = vld [vmem:[%s1 + $0x18] sm:$0xf]
          %v259 = vld [vmem:[%s1 + $0x1c] sm:$0xf]
          %v260 = vld [vmem:[%s1 + $0x20] sm:$0xf]
          %v261 = vld [vmem:[%s1 + $0x24] sm:$0xf]
          %v262 = vld [vmem:[%s1 + $0x28] sm:$0xf]
          %v263 = vld [vmem:[%s1 + $0x2c] sm:$0xf]
          %v264 = vld [vmem:[%s1 + $0x30] sm:$0xf]
          %v265 = vld [vmem:[%s1 + $0x34] sm:$0xf]
          %v266 = vld [vmem:[%s1 + $0x38] sm:$0xf]
          %v267 = vld [vmem:[%s1 + $0x3c] sm:$0xf]
          %v268 = vld [vmem:[%s2] sm:$0x1]
          %v270 = vlaneseq
          %v271 = vshrl.u32 %v270, 7
          %v272 = vsub.s32 0, %v271
          %v273 = vrot.slane %v268, %v272
          %v291 = vunpack.c.l.b16 %v236
          %v292 = vunpack.c.l.b16 %v237
          %v293 = vunpack.c.l.b16 %v238
          %v294 = vunpack.c.l.b16 %v239
          %v295 = vunpack.c.l.b16 %v240
          %v296 = vunpack.c.l.b16 %v241
          %v297 = vunpack.c.l.b16 %v242
          %v298 = vunpack.c.l.b16 %v243
          %v299 = vunpack.c.l.b16 %v244
          %v300 = vunpack.c.l.b16 %v245
          %v301 = vunpack.c.l.b16 %v246
          %v302 = vunpack.c.l.b16 %v247
          %v303 = vunpack.c.l.b16 %v248
          %v304 = vunpack.c.l.b16 %v249
          %v305 = vunpack.c.l.b16 %v250
          %v306 = vunpack.c.l.b16 %v251
          %v307 = vpack.c.b16 %v292, %v291
          %v308 = vpack.c.b16 %v294, %v293
          %v309 = vpack.c.b16 %v296, %v295
          %v310 = vpack.c.b16 %v298, %v297
          %v311 = vpack.c.b16 %v300, %v299
          %v312 = vpack.c.b16 %v302, %v301
          %v313 = vpack.c.b16 %v304, %v303
          %v314 = vpack.c.b16 %v306, %v305
          %v339 = vunpack.c.l.b16 %v252
          %v340 = vunpack.c.l.b16 %v253
          %v341 = vunpack.c.l.b16 %v254
          %v342 = vunpack.c.l.b16 %v255
          %v343 = vunpack.c.l.b16 %v256
          %v344 = vunpack.c.l.b16 %v257
          %v345 = vunpack.c.l.b16 %v258
          %v346 = vunpack.c.l.b16 %v259
          %v347 = vunpack.c.l.b16 %v260
          %v348 = vunpack.c.l.b16 %v261
          %v349 = vunpack.c.l.b16 %v262
          %v350 = vunpack.c.l.b16 %v263
          %v351 = vunpack.c.l.b16 %v264
          %v352 = vunpack.c.l.b16 %v265
          %v353 = vunpack.c.l.b16 %v266
          %v354 = vunpack.c.l.b16 %v267
          %v355 = vpack.c.b16 %v340, %v339
          %v356 = vpack.c.b16 %v342, %v341
          %v357 = vpack.c.b16 %v344, %v343
          %v358 = vpack.c.b16 %v346, %v345
          %v359 = vpack.c.b16 %v348, %v347
          %v360 = vpack.c.b16 %v350, %v349
          %v361 = vpack.c.b16 %v352, %v351
          %v362 = vpack.c.b16 %v354, %v353
          %371 = vmatprep.subr.bf16.mxu0 0
          %372 = vmatpush1.bf16.msra.mxu0 %v355
          %373 = vmatprep.subr.bf16.mxu0 0
          %374 = vmatpush1.bf16.msra.mxu0 %v356
          %375 = vmatprep.subr.bf16.mxu0 0
          %376 = vmatpush1.bf16.msra.mxu0 %v357
          %377 = vmatprep.subr.bf16.mxu0 0
          %378 = vmatpush1.bf16.msra.mxu0 %v358
          %379 = vmatprep.subr.bf16.mxu0 0
          %380 = vmatpush1.bf16.msra.mxu0 %v359
          %381 = vmatprep.subr.bf16.mxu0 0
          %382 = vmatpush1.bf16.msra.mxu0 %v360
          %383 = vmatprep.subr.bf16.mxu0 0
          %384 = vmatpush1.bf16.msra.mxu0 %v361
          %385 = vmatprep.subr.bf16.mxu0 0
          %386 = vmatpush1.bf16.msra.mxu0 %v362
          %387 = vmatprep.subr.bf16.mxu0 0
          %388 = vmatpush1.bf16.msra.mxu0 0
          %389 = vmatprep.subr.bf16.mxu0 0
          %390 = vmatpush1.bf16.msra.mxu0 0
          %391 = vmatprep.subr.bf16.mxu0 0
          %392 = vmatpush1.bf16.msra.mxu0 0
          %393 = vmatprep.subr.bf16.mxu0 0
          %394 = vmatpush1.bf16.msra.mxu0 0
          %395 = vmatprep.subr.bf16.mxu0 0
          %396 = vmatpush1.bf16.msra.mxu0 0
          %397 = vmatprep.subr.bf16.mxu0 0
          %398 = vmatpush1.bf16.msra.mxu0 0
          %399 = vmatprep.subr.bf16.mxu0 0
          %400 = vmatpush1.bf16.msra.mxu0 0
          %401 = vmatprep.subr.bf16.mxu0 0
          %402 = vmatpush1.bf16.msra.mxu0 0
          %403 = vmatprep.mubr.bf16.mxu0 0
          %404 = vmatmul.mubr.bf16.gmra.mrb[0].mxu0 %v307
          %v405 = vpop.f32.mrb[0].mxu0
          %v406 = vadd.f32 %v273, %v405
          %v407 = vpop.f32.mrb[0].mxu0
          %v408 = vpop.f32.mrb[0].mxu0
          %v409 = vadd.f32 %v273, %v408
          %v410 = vpop.f32.mrb[0].mxu0
          %411 = vmatprep.mubr.bf16.mxu0 0
          %412 = vmatmul.mubr.bf16.gmra.mrb[0].mxu0 %v308
          %v413 = vpop.f32.mrb[0].mxu0
          %v414 = vadd.f32 %v273, %v413
          %v415 = vpop.f32.mrb[0].mxu0
          %v416 = vpop.f32.mrb[0].mxu0
          %v417 = vadd.f32 %v273, %v416
          %v418 = vpop.f32.mrb[0].mxu0
          %419 = vmatprep.mubr.bf16.mxu0 0
          %420 = vmatmul.mubr.bf16.gmra.mrb[0].mxu0 %v309
          %v421 = vpop.f32.mrb[0].mxu0
          %v422 = vadd.f32 %v273, %v421
          %v423 = vpop.f32.mrb[0].mxu0
          %v424 = vpop.f32.mrb[0].mxu0
          %v425 = vadd.f32 %v273, %v424
          %v426 = vpop.f32.mrb[0].mxu0
          %427 = vmatprep.mubr.bf16.mxu0 0
          %428 = vmatmul.mubr.bf16.gmra.mrb[0].mxu0 %v310
          %v429 = vpop.f32.mrb[0].mxu0
          %v430 = vadd.f32 %v273, %v429
          %v431 = vpop.f32.mrb[0].mxu0
          %v432 = vpop.f32.mrb[0].mxu0
          %v433 = vadd.f32 %v273, %v432
          %v434 = vpop.f32.mrb[0].mxu0
          %435 = vmatprep.mubr.bf16.mxu0 0
          %436 = vmatmul.mubr.bf16.gmra.mrb[0].mxu0 %v311
          %v437 = vpop.f32.mrb[0].mxu0
          %v438 = vadd.f32 %v273, %v437
          %v439 = vpop.f32.mrb[0].mxu0
          %v440 = vpop.f32.mrb[0].mxu0
          %v441 = vadd.f32 %v273, %v440
          %v442 = vpop.f32.mrb[0].mxu0
          %443 = vmatprep.mubr.bf16.mxu0 0
          %444 = vmatmul.mubr.bf16.gmra.mrb[0].mxu0 %v312
          %v445 = vpop.f32.mrb[0].mxu0
          %v446 = vadd.f32 %v273, %v445
          %v447 = vpop.f32.mrb[0].mxu0
          %v448 = vpop.f32.mrb[0].mxu0
          %v449 = vadd.f32 %v273, %v448
          %v450 = vpop.f32.mrb[0].mxu0
          %451 = vmatprep.mubr.bf16.mxu0 0
          %452 = vmatmul.mubr.bf16.gmra.mrb[0].mxu0 %v313
          %v453 = vpop.f32.mrb[0].mxu0
          %v454 = vadd.f32 %v273, %v453
          %v455 = vpop.f32.mrb[0].mxu0
          %v456 = vpop.f32.mrb[0].mxu0
          %v457 = vadd.f32 %v273, %v456
          %v458 = vpop.f32.mrb[0].mxu0
          %459 = vmatprep.mubr.bf16.mxu0 0
          %460 = vmatmul.mubr.bf16.gmra.mrb[0].mxu0 %v314
          %v461 = vpop.f32.mrb[0].mxu0
          %v462 = vadd.f32 %v273, %v461
          %v463 = vpop.f32.mrb[0].mxu0
          %v464 = vpop.f32.mrb[0].mxu0
          %v465 = vadd.f32 %v273, %v464
          %v466 = vpop.f32.mrb[0].mxu0
          %467 = vdwg.mxu0
          %v468 = vmax.f32 %v406, 0.0
          %v469 = vmax.f32 %v409, 0.0
          %v470 = vmax.f32 %v414, 0.0
          %v471 = vmax.f32 %v417, 0.0
          %v472 = vmax.f32 %v422, 0.0
          %v473 = vmax.f32 %v425, 0.0
          %v474 = vmax.f32 %v430, 0.0
          %v475 = vmax.f32 %v433, 0.0
          %v476 = vmax.f32 %v438, 0.0
          %v477 = vmax.f32 %v441, 0.0
          %v478 = vmax.f32 %v446, 0.0
          %v479 = vmax.f32 %v449, 0.0
          %v480 = vmax.f32 %v454, 0.0
          %v481 = vmax.f32 %v457, 0.0
          %v482 = vmax.f32 %v462, 0.0
          %v483 = vmax.f32 %v465, 0.0
          %v484 = vpack.c.bf16 %v469, %v468
          %v485 = vpack.c.bf16 %v471, %v470
          %v486 = vpack.c.bf16 %v473, %v472
          %v487 = vpack.c.bf16 %v475, %v474
          %v488 = vpack.c.bf16 %v477, %v476
          %v489 = vpack.c.bf16 %v479, %v478
          %v490 = vpack.c.bf16 %v481, %v480
          %v491 = vpack.c.bf16 %v483, %v482
          %v492 = vld [vmem:[%s3] sm:$0xf]
          %v493 = vld [vmem:[%s3 + $0x4] sm:$0xf]
          %v494 = vld [vmem:[%s3 + $0x8] sm:$0xf]
          %v495 = vld [vmem:[%s3 + $0xc] sm:$0xf]
          %v500 = vunpack.c.l.b16 %v492
          %v501 = vunpack.c.l.b16 %v493
          %v502 = vunpack.c.l.b16 %v494
          %v503 = vunpack.c.l.b16 %v495
          %v504 = vpack.c.b16 %v501, %v500
          %v505 = vpack.c.b16 %v503, %v502
          %vm508 = vcmask 261120
          %v510 = vsel %vm508, %v484, 0
          %v513 = vsel %vm508, %v485, 0
          %v516 = vsel %vm508, %v486, 0
          %v519 = vsel %vm508, %v487, 0
          %v522 = vsel %vm508, %v488, 0
          %v525 = vsel %vm508, %v489, 0
          %v528 = vsel %vm508, %v490, 0
          %v531 = vsel %vm508, %v491, 0
          %533 = vmatprep.subr.bf16.mxu0 0
          %534 = vmatpush1.bf16.msra.mxu0 %v504
          %535 = vmatprep.subr.bf16.mxu0 0
          %536 = vmatpush1.bf16.msra.mxu0 %v505
          %537 = vmatprep.subr.bf16.mxu0 0
          %538 = vmatpush1.bf16.msra.mxu0 0
          %539 = vmatprep.subr.bf16.mxu0 0
          %540 = vmatpush1.bf16.msra.mxu0 0
          %541 = vmatprep.subr.bf16.mxu0 0
          %542 = vmatpush1.bf16.msra.mxu0 0
          %543 = vmatprep.subr.bf16.mxu0 0
          %544 = vmatpush1.bf16.msra.mxu0 0
          %545 = vmatprep.subr.bf16.mxu0 0
          %546 = vmatpush1.bf16.msra.mxu0 0
          %547 = vmatprep.subr.bf16.mxu0 0
          %548 = vmatpush1.bf16.msra.mxu0 0
          %549 = vmatprep.subr.bf16.mxu0 0
          %550 = vmatpush1.bf16.msra.mxu0 0
          %551 = vmatprep.subr.bf16.mxu0 0
          %552 = vmatpush1.bf16.msra.mxu0 0
          %553 = vmatprep.subr.bf16.mxu0 0
          %554 = vmatpush1.bf16.msra.mxu0 0
          %555 = vmatprep.subr.bf16.mxu0 0
          %556 = vmatpush1.bf16.msra.mxu0 0
          %557 = vmatprep.subr.bf16.mxu0 0
          %558 = vmatpush1.bf16.msra.mxu0 0
          %559 = vmatprep.subr.bf16.mxu0 0
          %560 = vmatpush1.bf16.msra.mxu0 0
          %561 = vmatprep.subr.bf16.mxu0 0
          %562 = vmatpush1.bf16.msra.mxu0 0
          %563 = vmatprep.subr.bf16.mxu0 0
          %564 = vmatpush1.bf16.msra.mxu0 0
          %565 = vmatprep.mubr.bf16.mxu0 0
          %566 = vmatmul.mubr.bf16.gmra.mrb[0].mxu0 %v510
          %v567 = vpop.f32.mrb[0].mxu0
          %v568 = vadd.f32 0.0, %v567
          %v569 = vpop.f32.mrb[0].mxu0
          %v570 = vpop.f32.mrb[0].mxu0
          %v571 = vadd.f32 0.0, %v570
          %v572 = vpop.f32.mrb[0].mxu0
          %573 = vmatprep.mubr.bf16.mxu0 0
          %574 = vmatmul.mubr.bf16.gmra.mrb[0].mxu0 %v513
          %v575 = vpop.f32.mrb[0].mxu0
          %v576 = vadd.f32 0.0, %v575
          %v577 = vpop.f32.mrb[0].mxu0
          %v578 = vpop.f32.mrb[0].mxu0
          %v579 = vadd.f32 0.0, %v578
          %v580 = vpop.f32.mrb[0].mxu0
          %581 = vmatprep.mubr.bf16.mxu0 0
          %582 = vmatmul.mubr.bf16.gmra.mrb[0].mxu0 %v516
          %v583 = vpop.f32.mrb[0].mxu0
          %v584 = vadd.f32 0.0, %v583
          %v585 = vpop.f32.mrb[0].mxu0
          %v586 = vpop.f32.mrb[0].mxu0
          %v587 = vadd.f32 0.0, %v586
          %v588 = vpop.f32.mrb[0].mxu0
          %589 = vmatprep.mubr.bf16.mxu0 0
          %590 = vmatmul.mubr.bf16.gmra.mrb[0].mxu0 %v519
          %v591 = vpop.f32.mrb[0].mxu0
          %v592 = vadd.f32 0.0, %v591
          %v593 = vpop.f32.mrb[0].mxu0
          %v594 = vpop.f32.mrb[0].mxu0
          %v595 = vadd.f32 0.0, %v594
          %v596 = vpop.f32.mrb[0].mxu0
          %597 = vmatprep.mubr.bf16.mxu0 0
          %598 = vmatmul.mubr.bf16.gmra.mrb[0].mxu0 %v522
          %v599 = vpop.f32.mrb[0].mxu0
          %v600 = vadd.f32 0.0, %v599
          %v601 = vpop.f32.mrb[0].mxu0
          %v602 = vpop.f32.mrb[0].mxu0
          %v603 = vadd.f32 0.0, %v602
          %v604 = vpop.f32.mrb[0].mxu0
          %605 = vmatprep.mubr.bf16.mxu0 0
          %606 = vmatmul.mubr.bf16.gmra.mrb[0].mxu0 %v525
          %v607 = vpop.f32.mrb[0].mxu0
          %v608 = vadd.f32 0.0, %v607
          %v609 = vpop.f32.mrb[0].mxu0
          %v610 = vpop.f32.mrb[0].mxu0
          %v611 = vadd.f32 0.0, %v610
          %v612 = vpop.f32.mrb[0].mxu0
          %613 = vmatprep.mubr.bf16.mxu0 0
          %614 = vmatmul.mubr.bf16.gmra.mrb[0].mxu0 %v528
          %v615 = vpop.f32.mrb[0].mxu0
          %v616 = vadd.f32 0.0, %v615
          %v617 = vpop.f32.mrb[0].mxu0
          %v618 = vpop.f32.mrb[0].mxu0
          %v619 = vadd.f32 0.0, %v618
          %v620 = vpop.f32.mrb[0].mxu0
          %621 = vmatprep.mubr.bf16.mxu0 0
          %622 = vmatmul.mubr.bf16.gmra.mrb[0].mxu0 %v531
          %v623 = vpop.f32.mrb[0].mxu0
          %v624 = vadd.f32 0.0, %v623
          %v625 = vpop.f32.mrb[0].mxu0
          %v626 = vpop.f32.mrb[0].mxu0
          %v627 = vadd.f32 0.0, %v626
          %v628 = vpop.f32.mrb[0].mxu0
          %629 = vdwg.mxu0
          %s630 = smul.u32 %s22, 128
          %v631 = vpack.c.bf16 %v571, %v568
          %v632 = vpack.c.bf16 %v579, %v576
          %v633 = vpack.c.bf16 %v587, %v584
          %v634 = vpack.c.bf16 %v595, %v592
          %v635 = vpack.c.bf16 %v603, %v600
          %v636 = vpack.c.bf16 %v611, %v608
          %v637 = vpack.c.bf16 %v619, %v616
          %v638 = vpack.c.bf16 %v627, %v624
          %s639 = sshra.s32 %s630, 4
          %s640 = sand.u32 %s630, 15
          %s641 = smul.addr %s639, 8
          %s642 = scalar_lea.vmem [#allocation2], %s641
          %643 = vst [vmem:[%s642] sm:$0xff] %v631
          %644 = vst [vmem:[%s642 + $0x8] sm:$0xff] %v632
          %645 = vst [vmem:[%s642 + $0x10] sm:$0xff] %v633
          %646 = vst [vmem:[%s642 + $0x18] sm:$0xff] %v634
          %647 = vst [vmem:[%s642 + $0x20] sm:$0xff] %v635
          %648 = vst [vmem:[%s642 + $0x28] sm:$0xff] %v636
          %649 = vst [vmem:[%s642 + $0x30] sm:$0xff] %v637
          %650 = vst [vmem:[%s642 + $0x38] sm:$0xff] %v638
          %651 = vst [vmem:[#allocation3] sm:$0xff] 0.0
          %652 = vst [vmem:[#allocation3 + $0x8] sm:$0xff] 0.0
          %653 = vst [vmem:[#allocation3 + $0x10] sm:$0xff] 0.0
          %654 = vst [vmem:[#allocation3 + $0x18] sm:$0xff] 0.0
          %655 = vst [vmem:[#allocation3 + $0x20] sm:$0xff] 0.0
          %656 = vst [vmem:[#allocation3 + $0x28] sm:$0xff] 0.0
          %657 = vst [vmem:[#allocation3 + $0x30] sm:$0xff] 0.0
          %658 = vst [vmem:[#allocation3 + $0x38] sm:$0xff] 0.0
          %659 = vst [vmem:[#allocation3 + $0x40] sm:$0xff] 0.0
          %660 = vst [vmem:[#allocation3 + $0x48] sm:$0xff] 0.0
          %661 = vst [vmem:[#allocation3 + $0x50] sm:$0xff] 0.0
          %662 = vst [vmem:[#allocation3 + $0x58] sm:$0xff] 0.0
          %663 = vst [vmem:[#allocation3 + $0x60] sm:$0xff] 0.0
          %664 = vst [vmem:[#allocation3 + $0x68] sm:$0xff] 0.0
          %665 = vst [vmem:[#allocation3 + $0x70] sm:$0xff] 0.0
          %666 = vst [vmem:[#allocation3 + $0x78] sm:$0xff] 0.0
        $region44: #{tpu_custom_call.1} parent=39 // pred_fallthru
          _
        %p667 = scmp.eq.s32.totalorder %s21, 1
        // Predicated region
        $region45: #{tpu_custom_call.1} parent=39 // pred_check
          %p668 = pneg %p667
        $region46: #{tpu_custom_call.1} parent=39 // pred_check_branch
          %670 = sbr.rel (%p668) target = $region48
        $region47: #{tpu_custom_call.1} parent=39 // pred_region
          %v671 = vld [vmem:[%s228] sm:$0xf]
          %v672 = vld [vmem:[%s228 + $0x4] sm:$0xf]
          %v673 = vld [vmem:[%s228 + $0x8] sm:$0xf]
          %v674 = vld [vmem:[%s228 + $0xc] sm:$0xf]
          %v675 = vld [vmem:[%s228 + $0x10] sm:$0xf]
          %v676 = vld [vmem:[%s228 + $0x14] sm:$0xf]
          %v677 = vld [vmem:[%s228 + $0x18] sm:$0xf]
          %v678 = vld [vmem:[%s228 + $0x1c] sm:$0xf]
          %v679 = vld [vmem:[%s228 + $0x20] sm:$0xf]
          %v680 = vld [vmem:[%s228 + $0x24] sm:$0xf]
          %v681 = vld [vmem:[%s228 + $0x28] sm:$0xf]
          %v682 = vld [vmem:[%s228 + $0x2c] sm:$0xf]
          %v683 = vld [vmem:[%s228 + $0x30] sm:$0xf]
          %v684 = vld [vmem:[%s228 + $0x34] sm:$0xf]
          %v685 = vld [vmem:[%s228 + $0x38] sm:$0xf]
          %v686 = vld [vmem:[%s228 + $0x3c] sm:$0xf]
          %v687 = vld [vmem:[#allocation2] sm:$0xff]
          %v688 = vld [vmem:[#allocation2 + $0x8] sm:$0xff]
          %v689 = vld [vmem:[#allocation2 + $0x10] sm:$0xff]
          %v690 = vld [vmem:[#allocation2 + $0x18] sm:$0xff]
          %v691 = vld [vmem:[#allocation2 + $0x20] sm:$0xff]
          %v692 = vld [vmem:[#allocation2 + $0x28] sm:$0xff]
          %v693 = vld [vmem:[#allocation2 + $0x30] sm:$0xff]
          %v694 = vld [vmem:[#allocation2 + $0x38] sm:$0xff]
          %v695 = vld [vmem:[%s4] sm:$0x1]
          %v697 = vlaneseq
          %v698 = vshrl.u32 %v697, 7
          %v699 = vsub.s32 0, %v698
          %v700 = vrot.slane %v695, %v699
          %v718 = vunpack.c.l.b16 %v671
          %v719 = vunpack.c.l.b16 %v672
          %v720 = vunpack.c.l.b16 %v673
          %v721 = vunpack.c.l.b16 %v674
          %v722 = vunpack.c.l.b16 %v675
          %v723 = vunpack.c.l.b16 %v676
          %v724 = vunpack.c.l.b16 %v677
          %v725 = vunpack.c.l.b16 %v678
          %v726 = vunpack.c.l.b16 %v679
          %v727 = vunpack.c.l.b16 %v680
          %v728 = vunpack.c.l.b16 %v681
          %v729 = vunpack.c.l.b16 %v682
          %v730 = vunpack.c.l.b16 %v683
          %v731 = vunpack.c.l.b16 %v684
          %v732 = vunpack.c.l.b16 %v685
          %v733 = vunpack.c.l.b16 %v686
          %v734 = vpack.c.b16 %v719, %v718
          %v735 = vpack.c.b16 %v721, %v720
          %v736 = vpack.c.b16 %v723, %v722
          %v737 = vpack.c.b16 %v725, %v724
          %v738 = vpack.c.b16 %v727, %v726
          %v739 = vpack.c.b16 %v729, %v728
          %v740 = vpack.c.b16 %v731, %v730
          %v741 = vpack.c.b16 %v733, %v732
          %750 = vmatprep.subr.bf16.mxu0 0
          %751 = vmatpush1.bf16.msra.mxu0 %v687
          %752 = vmatprep.subr.bf16.mxu0 0
          %753 = vmatpush1.bf16.msra.mxu0 %v688
          %754 = vmatprep.subr.bf16.mxu0 0
          %755 = vmatpush1.bf16.msra.mxu0 %v689
          %756 = vmatprep.subr.bf16.mxu0 0
          %757 = vmatpush1.bf16.msra.mxu0 %v690
          %758 = vmatprep.subr.bf16.mxu0 0
          %759 = vmatpush1.bf16.msra.mxu0 %v691
          %760 = vmatprep.subr.bf16.mxu0 0
          %761 = vmatpush1.bf16.msra.mxu0 %v692
          %762 = vmatprep.subr.bf16.mxu0 0
          %763 = vmatpush1.bf16.msra.mxu0 %v693
          %764 = vmatprep.subr.bf16.mxu0 0
          %765 = vmatpush1.bf16.msra.mxu0 %v694
          %766 = vmatprep.subr.bf16.mxu0 0
          %767 = vmatpush1.bf16.msra.mxu0 0
          %768 = vmatprep.subr.bf16.mxu0 0
          %769 = vmatpush1.bf16.msra.mxu0 0
          %770 = vmatprep.subr.bf16.mxu0 0
          %771 = vmatpush1.bf16.msra.mxu0 0
          %772 = vmatprep.subr.bf16.mxu0 0
          %773 = vmatpush1.bf16.msra.mxu0 0
          %774 = vmatprep.subr.bf16.mxu0 0
          %775 = vmatpush1.bf16.msra.mxu0 0
          %776 = vmatprep.subr.bf16.mxu0 0
          %777 = vmatpush1.bf16.msra.mxu0 0
          %778 = vmatprep.subr.bf16.mxu0 0
          %779 = vmatpush1.bf16.msra.mxu0 0
          %780 = vmatprep.subr.bf16.mxu0 0
          %781 = vmatpush1.bf16.msra.mxu0 0
          %782 = vmatprep.mubr.bf16.mxu0 0
          %783 = vmatmul.mubr.bf16.gmra.mrb[0].mxu0 %v734
          %v784 = vpop.f32.mrb[0].mxu0
          %v785 = vadd.f32 %v700, %v784
          %v786 = vpop.f32.mrb[0].mxu0
          %v787 = vpop.f32.mrb[0].mxu0
          %v788 = vadd.f32 %v700, %v787
          %v789 = vpop.f32.mrb[0].mxu0
          %790 = vmatprep.mubr.bf16.mxu0 0
          %791 = vmatmul.mubr.bf16.gmra.mrb[0].mxu0 %v735
          %v792 = vpop.f32.mrb[0].mxu0
          %v793 = vadd.f32 %v700, %v792
          %v794 = vpop.f32.mrb[0].mxu0
          %v795 = vpop.f32.mrb[0].mxu0
          %v796 = vadd.f32 %v700, %v795
          %v797 = vpop.f32.mrb[0].mxu0
          %798 = vmatprep.mubr.bf16.mxu0 0
          %799 = vmatmul.mubr.bf16.gmra.mrb[0].mxu0 %v736
          %v800 = vpop.f32.mrb[0].mxu0
          %v801 = vadd.f32 %v700, %v800
          %v802 = vpop.f32.mrb[0].mxu0
          %v803 = vpop.f32.mrb[0].mxu0
          %v804 = vadd.f32 %v700, %v803
          %v805 = vpop.f32.mrb[0].mxu0
          %806 = vmatprep.mubr.bf16.mxu0 0
          %807 = vmatmul.mubr.bf16.gmra.mrb[0].mxu0 %v737
          %v808 = vpop.f32.mrb[0].mxu0
          %v809 = vadd.f32 %v700, %v808
          %v810 = vpop.f32.mrb[0].mxu0
          %v811 = vpop.f32.mrb[0].mxu0
          %v812 = vadd.f32 %v700, %v811
          %v813 = vpop.f32.mrb[0].mxu0
          %814 = vmatprep.mubr.bf16.mxu0 0
          %815 = vmatmul.mubr.bf16.gmra.mrb[0].mxu0 %v738
          %v816 = vpop.f32.mrb[0].mxu0
          %v817 = vadd.f32 %v700, %v816
          %v818 = vpop.f32.mrb[0].mxu0
          %v819 = vpop.f32.mrb[0].mxu0
          %v820 = vadd.f32 %v700, %v819
          %v821 = vpop.f32.mrb[0].mxu0
          %822 = vmatprep.mubr.bf16.mxu0 0
          %823 = vmatmul.mubr.bf16.gmra.mrb[0].mxu0 %v739
          %v824 = vpop.f32.mrb[0].mxu0
          %v825 = vadd.f32 %v700, %v824
          %v826 = vpop.f32.mrb[0].mxu0
          %v827 = vpop.f32.mrb[0].mxu0
          %v828 = vadd.f32 %v700, %v827
          %v829 = vpop.f32.mrb[0].mxu0
          %830 = vmatprep.mubr.bf16.mxu0 0
          %831 = vmatmul.mubr.bf16.gmra.mrb[0].mxu0 %v740
          %v832 = vpop.f32.mrb[0].mxu0
          %v833 = vadd.f32 %v700, %v832
          %v834 = vpop.f32.mrb[0].mxu0
          %v835 = vpop.f32.mrb[0].mxu0
          %v836 = vadd.f32 %v700, %v835
          %v837 = vpop.f32.mrb[0].mxu0
          %838 = vmatprep.mubr.bf16.mxu0 0
          %839 = vmatmul.mubr.bf16.gmra.mrb[0].mxu0 %v741
          %v840 = vpop.f32.mrb[0].mxu0
          %v841 = vadd.f32 %v700, %v840
          %v842 = vpop.f32.mrb[0].mxu0
          %v843 = vpop.f32.mrb[0].mxu0
          %v844 = vadd.f32 %v700, %v843
          %v845 = vpop.f32.mrb[0].mxu0
          %846 = vdwg.mxu0
          %847 = vst [vmem:[#allocation3] sm:$0xff] %v785
          %848 = vst [vmem:[#allocation3 + $0x8] sm:$0xff] %v788
          %849 = vst [vmem:[#allocation3 + $0x10] sm:$0xff] %v793
          %850 = vst [vmem:[#allocation3 + $0x18] sm:$0xff] %v796
          %851 = vst [vmem:[#allocation3 + $0x20] sm:$0xff] %v801
          %852 = vst [vmem:[#allocation3 + $0x28] sm:$0xff] %v804
          %853 = vst [vmem:[#allocation3 + $0x30] sm:$0xff] %v809
          %854 = vst [vmem:[#allocation3 + $0x38] sm:$0xff] %v812
          %855 = vst [vmem:[#allocation3 + $0x40] sm:$0xff] %v817
          %856 = vst [vmem:[#allocation3 + $0x48] sm:$0xff] %v820
          %857 = vst [vmem:[#allocation3 + $0x50] sm:$0xff] %v825
          %858 = vst [vmem:[#allocation3 + $0x58] sm:$0xff] %v828
          %859 = vst [vmem:[#allocation3 + $0x60] sm:$0xff] %v833
          %860 = vst [vmem:[#allocation3 + $0x68] sm:$0xff] %v836
          %861 = vst [vmem:[#allocation3 + $0x70] sm:$0xff] %v841
          %862 = vst [vmem:[#allocation3 + $0x78] sm:$0xff] %v844
        $region48: #{tpu_custom_call.1} parent=39 // pred_fallthru
          _
        // Predicated region
        $region49: #{tpu_custom_call.1} parent=39 // pred_check
          %p863 = pneg %p157
        $region50: #{tpu_custom_call.1} parent=39 // pred_check_branch
          %865 = sbr.rel (%p863) target = $region52
        $region51: #{tpu_custom_call.1} parent=39 // pred_region
          %s866 = smul.u32 16, %s22
          %s868 = ssub.s32 2048, 2048
          %869 = vsyncadd [#allocation4], %s868
          %s870 = smul.addr %s866, 128
          %s871 = scalar_lea.hbm %s5, %s870
          %s872 = sshll.u32 [#allocation3], 4
          %s873 = int_to_ptr.vmem [resolvable:$true] %s872
          %878 = dma.vmem_to_hbm [thread:$0]  %s873, 2048, %s871, [#allocation4], 128, 128, 8
        $region52: #{tpu_custom_call.1} parent=39 // pred_fallthru
          _
        // Predicated region
        $region53: #{tpu_custom_call.1} parent=39 // pred_check
          %p879 = pneg %p157
        $region54: #{tpu_custom_call.1} parent=39 // pred_check_branch
          %881 = sbr.rel (%p879) target = $region56
        $region55: #{tpu_custom_call.1} parent=39 // pred_region
          %882 = dma.done [#allocation4], 2048
        $region56: #{tpu_custom_call.1} parent=39 // pred_fallthru
          _
      $region40: #{tpu_custom_call.1} parent=5 // pred_fallthru
        _
      %p883 = scmp.le.s32.totalorder 2, %s12
      // Predicated region
      $region57: #{tpu_custom_call.1} parent=5 // pred_check
        %p884 = pneg %p883
      $region58: #{tpu_custom_call.1} parent=5 // pred_check_branch
        %886 = sbr.rel (%p884) target = $region60
      $region59: #{tpu_custom_call.1} parent=5 // pred_region
        %s887 = ssub.s32 %s12, 2
      $region60: #{tpu_custom_call.1} parent=5 // pred_fallthru
        _
    $region6: #{tpu_custom_call.1} parent=1 // loop_footer
      %s16 = sadd.s32 1, %s12
    $region7: #{tpu_custom_call.1} parent=1 // loop_footer_branch
      %11 = sbr.rel target = $region3
    $region8: #{tpu_custom_call.1} parent=1 // loop_exit
      _
    %888 = vsyncpa [#allocation4], 1
    %s889 = scalar_lea.sflag [#allocation4], 1
    %890 = vsyncpa %s889, 1

</llo_original>
